<compile_context>
chip_gen: v6e
topology: v6e:2x2x1
jax: 0.10.0
libtpu: 0.0.40
codegen_flags: <defaults>
</compile_context>

<pallas_src>
import math

import jax
import jax.numpy as jnp
import numpy as np
from jax import lax
from jax.experimental import pallas as pl
from jax.experimental.pallas import tpu as pltpu


# --------------------------------- kernel ------------------------------------

def attention_fusion_kernel(x_ref, wq_ref, bq_ref, wk_ref, bk_ref,
                            wv_ref, bv_ref, wo_ref, bo_ref, o_ref):
    # x block: (S, D) f32 (batch dim squeezed by the BlockSpec).
    x = x_ref[...].astype(jnp.bfloat16)

    # Q / K / V projections: bf16 operands, f32 accumulation on the MXU.
    # The 1/sqrt(H) attention scale is already folded into wq / bq.
    q = jnp.dot(x, wq_ref[...], preferred_element_type=jnp.float32) + bq_ref[...]
    k = jnp.dot(x, wk_ref[...], preferred_element_type=jnp.float32) + bk_ref[...]
    v = jnp.dot(x, wv_ref[...], preferred_element_type=jnp.float32) + bv_ref[...]

    # Attention scores (S, S): contract the hidden dim of both operands
    # directly (no explicit k.T materialized in the kernel).  f32 math.
    s = lax.dot_general(q, k, (((1,), (1,)), ((), ())),
                        preferred_element_type=jnp.float32)

    # Numerically-stable softmax in f32; reciprocal goes to the EUP slot.
    m = jnp.max(s, axis=-1, keepdims=True)
    p = jnp.exp(s - m)
    attn = p * pl.reciprocal(jnp.sum(p, axis=-1, keepdims=True), approx=True)

    # Attention-weighted values: (S, H), f32.
    out = jnp.dot(attn, v, preferred_element_type=jnp.float32)

    # Output projection to 256 (lane-dense): bf16 operands, f32 accumulation.
    y = jnp.dot(out.astype(jnp.bfloat16), wo_ref[...],
                preferred_element_type=jnp.float32) + bo_ref[...]
    o_ref[...] = y


# -------------------------------- wrapper ------------------------------------

def attention_fusion(x, kp):
    """x: (B, S, input_dims) f32; kp: kernel params from prepare_kernel_params.

    Returns (B, S, 256) f32.
    """
    B, S, D = x.shape
    H = kp["wq"].shape[1]
    O = kp["wo"].shape[1]

    # Advisory cost estimate (helps XLA schedule around this tiny call).
    flops = (2 * B * S * D * H * 3          # q/k/v projections
             + 2 * B * S * S * H * 2        # scores + attn @ v
             + 2 * B * S * H * O)           # out_proj
    bytes_accessed = (
        x.size * x.dtype.itemsize
        + sum(int(v.size) * v.dtype.itemsize for v in kp.values())
        + B * S * O * 4)

    vmem = pltpu.MemorySpace.VMEM
    grid_spec = pltpu.PrefetchScalarGridSpec(
        num_scalar_prefetch=0,
        grid=(B,),
        in_specs=[
            # activations: one batch element per grid step (batch squeezed)
            pl.BlockSpec((None, S, D), lambda b: (b, 0, 0), memory_space=vmem),
            # weights / biases: same block every step -> stay VMEM-resident
            pl.BlockSpec((D, H), lambda b: (0, 0), memory_space=vmem),
            pl.BlockSpec((1, H), lambda b: (0, 0), memory_space=vmem),
            pl.BlockSpec((D, H), lambda b: (0, 0), memory_space=vmem),
            pl.BlockSpec((1, H), lambda b: (0, 0), memory_space=vmem),
            pl.BlockSpec((D, H), lambda b: (0, 0), memory_space=vmem),
            pl.BlockSpec((1, H), lambda b: (0, 0), memory_space=vmem),
            pl.BlockSpec((H, O), lambda b: (0, 0), memory_space=vmem),
            pl.BlockSpec((1, O), lambda b: (0, 0), memory_space=vmem),
        ],
        out_specs=pl.BlockSpec((None, S, O), lambda b: (b, 0, 0),
                               memory_space=vmem),
    )

    return pl.pallas_call(
        attention_fusion_kernel,
        out_shape=jax.ShapeDtypeStruct((B, S, O), jnp.float32),
        grid_spec=grid_spec,
        compiler_params=pltpu.CompilerParams(
            dimension_semantics=("parallel",),      # megacore sharding on v7x
            vmem_limit_bytes=32 * 1024 * 1024),     # explicit, ample headroom
        cost_estimate=pl.CostEstimate(
            flops=flops, transcendentals=B * S * S,
            bytes_accessed=bytes_accessed),
    )(x, kp["wq"], kp["bq"], kp["wk"], kp["bk"],
      kp["wv"], kp["bv"], kp["wo"], kp["bo"])


# ------------------------------ params / ref ----------------------------------

def init_params(key, *, input_dims, hidden_dim, out_dim=256):
    """f32 'module' parameters, stored as (in, out) (transposed vs torch)."""
    ks = jax.random.split(key, 8)
    scale_in = 1.0 / math.sqrt(input_dims)
    scale_h = 1.0 / math.sqrt(hidden_dim)
    return dict(
        wq=jax.random.normal(ks[0], (input_dims, hidden_dim), jnp.float32) * scale_in,
        bq=jax.random.normal(ks[1], (1, hidden_dim), jnp.float32) * 0.02,
        wk=jax.random.normal(ks[2], (input_dims, hidden_dim), jnp.float32) * scale_in,
        bk=jax.random.normal(ks[3], (1, hidden_dim), jnp.float32) * 0.02,
        wv=jax.random.normal(ks[4], (input_dims, hidden_dim), jnp.float32) * scale_in,
        bv=jax.random.normal(ks[5], (1, hidden_dim), jnp.float32) * 0.02,
        wo=jax.random.normal(ks[6], (hidden_dim, out_dim), jnp.float32) * scale_h,
        bo=jax.random.normal(ks[7], (1, out_dim), jnp.float32) * 0.02,
    )


def prepare_kernel_params(p):
    """One-time, offline conversion: bf16 weights + attention scale folded
    into wq/bq.  Biases stay f32 (negligible bytes, keeps the adds in f32)."""
    hidden_dim = p["wq"].shape[1]
    scale = 1.0 / math.sqrt(float(hidden_dim))
    return dict(
        wq=(p["wq"] * scale).astype(jnp.bfloat16),
        bq=(p["bq"] * scale).astype(jnp.float32),
        wk=p["wk"].astype(jnp.bfloat16),
        bk=p["bk"].astype(jnp.float32),
        wv=p["wv"].astype(jnp.bfloat16),
        bv=p["bv"].astype(jnp.float32),
        wo=p["wo"].astype(jnp.bfloat16),
        bo=p["bo"].astype(jnp.float32),
    )


def ref_attention_fusion(x, p):
    """Pure-JAX f32 reference matching the PyTorch forward exactly."""
    q = x @ p["wq"] + p["bq"]
    k = x @ p["wk"] + p["bk"]
    v = x @ p["wv"] + p["bv"]
    s = jnp.einsum("bqh,bkh->bqk", q, k) / math.sqrt(k.shape[-1])
    attn = jax.nn.softmax(s, axis=-1)
    out = jnp.einsum("bqk,bkh->bqh", attn, v)
    return out @ p["wo"] + p["bo"]


# ---------------------------------- main --------------------------------------

if __name__ == "__main__":
    B, S = 2, 16
    INPUT_DIMS, HIDDEN_DIM = 64, 128   # out_proj maps hidden -> 256 (as in module)

    key = jax.random.PRNGKey(0)
    kx, kp = jax.random.split(key)
    x = jax.random.normal(kx, (B, S, INPUT_DIMS), jnp.float32)
    params = init_params(kp, input_dims=INPUT_DIMS, hidden_dim=HIDDEN_DIM)
    kernel_params = prepare_kernel_params(params)   # one-time: bf16 + scale fold

    out = jax.block_until_ready(attention_fusion(x, kernel_params))
    assert out.shape == (B, S, 256), out.shape

    # Compare against the exact f32 reference of the PyTorch module; tolerance
    # widened to account for bf16 weight/operand rounding (softmax and all
    # accumulation stayed in f32).
    ref = np.asarray(ref_attention_fusion(x, params))
    got = np.asarray(out)
    if not np.allclose(got, ref, atol=3e-2, rtol=3e-2):
        raise AssertionError(
            f"mismatch vs reference, max abs err {np.max(np.abs(got - ref))}")

    print("KERNEL_OK")
</pallas_src>

<mosaic_0001>
module attributes {stable_mosaic.version = 11 : i64} {
  func.func @attention_fusion_kernel(%arg0: i32, %arg1: memref<1x16x64xf32, #tpu.memory_space<vmem>>, %arg2: memref<64x128xbf16, #tpu.memory_space<vmem>>, %arg3: memref<1x128xf32, #tpu.memory_space<vmem>>, %arg4: memref<64x128xbf16, #tpu.memory_space<vmem>>, %arg5: memref<1x128xf32, #tpu.memory_space<vmem>>, %arg6: memref<64x128xbf16, #tpu.memory_space<vmem>>, %arg7: memref<1x128xf32, #tpu.memory_space<vmem>>, %arg8: memref<128x256xbf16, #tpu.memory_space<vmem>>, %arg9: memref<1x256xf32, #tpu.memory_space<vmem>>, %arg10: memref<1x16x256xf32, #tpu.memory_space<vmem>>) attributes {dimension_semantics = [#tpu.dimension_semantics<parallel>], iteration_bounds = array<i64: 2>, scalar_prefetch = 0 : i64, scratch_operands = 0 : i64, tpu.core_type = #tpu.core_type<tc>, window_params = [{transform_indices = @transform_0, window_bounds = array<i64: 1, 16, 64>}, {pipeline_mode = #tpu.pipeline_mode<synchronous>, transform_indices = @transform_1, window_bounds = array<i64: 64, 128>}, {pipeline_mode = #tpu.pipeline_mode<synchronous>, transform_indices = @transform_2, window_bounds = array<i64: 1, 128>}, {pipeline_mode = #tpu.pipeline_mode<synchronous>, transform_indices = @transform_3, window_bounds = array<i64: 64, 128>}, {pipeline_mode = #tpu.pipeline_mode<synchronous>, transform_indices = @transform_4, window_bounds = array<i64: 1, 128>}, {pipeline_mode = #tpu.pipeline_mode<synchronous>, transform_indices = @transform_5, window_bounds = array<i64: 64, 128>}, {pipeline_mode = #tpu.pipeline_mode<synchronous>, transform_indices = @transform_6, window_bounds = array<i64: 1, 128>}, {pipeline_mode = #tpu.pipeline_mode<synchronous>, transform_indices = @transform_7, window_bounds = array<i64: 128, 256>}, {pipeline_mode = #tpu.pipeline_mode<synchronous>, transform_indices = @transform_8, window_bounds = array<i64: 1, 256>}, {transform_indices = @transform_9, window_bounds = array<i64: 1, 16, 256>}]} {
    %c0 = arith.constant 0 : index
    %c0_0 = arith.constant 0 : index
    %c0_1 = arith.constant 0 : index
    %0 = vector.load %arg1[%c0, %c0_0, %c0_1] : memref<1x16x64xf32, #tpu.memory_space<vmem>>, vector<1x16x64xf32>
    %1 = vector.shape_cast %0 : vector<1x16x64xf32> to vector<16x64xf32>
    %2 = arith.truncf %1 : vector<16x64xf32> to vector<16x64xbf16>
    %c0_2 = arith.constant 0 : index
    %c0_3 = arith.constant 0 : index
    %3 = vector.load %arg2[%c0_2, %c0_3] : memref<64x128xbf16, #tpu.memory_space<vmem>>, vector<64x128xbf16>
    %cst = arith.constant dense<0.000000e+00> : vector<16x128xf32>
    %4 = tpu.matmul %2, %3, %cst {dimension_numbers = #tpu.dot_dimension_numbers<[1], [0], [0], [1], [0, 0, 1, 1], [], []>} : vector<16x64xbf16>, vector<64x128xbf16>, vector<16x128xf32> -> vector<16x128xf32>
    %c0_4 = arith.constant 0 : index
    %c0_5 = arith.constant 0 : index
    %5 = vector.load %arg3[%c0_4, %c0_5] : memref<1x128xf32, #tpu.memory_space<vmem>>, vector<1x128xf32>
    %6 = vector.broadcast %5 : vector<1x128xf32> to vector<16x128xf32>
    %7 = arith.addf %4, %6 : vector<16x128xf32>
    %c0_6 = arith.constant 0 : index
    %c0_7 = arith.constant 0 : index
    %8 = vector.load %arg4[%c0_6, %c0_7] : memref<64x128xbf16, #tpu.memory_space<vmem>>, vector<64x128xbf16>
    %cst_8 = arith.constant dense<0.000000e+00> : vector<16x128xf32>
    %9 = tpu.matmul %2, %8, %cst_8 {dimension_numbers = #tpu.dot_dimension_numbers<[1], [0], [0], [1], [0, 0, 1, 1], [], []>} : vector<16x64xbf16>, vector<64x128xbf16>, vector<16x128xf32> -> vector<16x128xf32>
    %c0_9 = arith.constant 0 : index
    %c0_10 = arith.constant 0 : index
    %10 = vector.load %arg5[%c0_9, %c0_10] : memref<1x128xf32, #tpu.memory_space<vmem>>, vector<1x128xf32>
    %11 = vector.broadcast %10 : vector<1x128xf32> to vector<16x128xf32>
    %12 = arith.addf %9, %11 : vector<16x128xf32>
    %c0_11 = arith.constant 0 : index
    %c0_12 = arith.constant 0 : index
    %13 = vector.load %arg6[%c0_11, %c0_12] : memref<64x128xbf16, #tpu.memory_space<vmem>>, vector<64x128xbf16>
    %cst_13 = arith.constant dense<0.000000e+00> : vector<16x128xf32>
    %14 = tpu.matmul %2, %13, %cst_13 {dimension_numbers = #tpu.dot_dimension_numbers<[1], [0], [0], [1], [0, 0, 1, 1], [], []>} : vector<16x64xbf16>, vector<64x128xbf16>, vector<16x128xf32> -> vector<16x128xf32>
    %c0_14 = arith.constant 0 : index
    %c0_15 = arith.constant 0 : index
    %15 = vector.load %arg7[%c0_14, %c0_15] : memref<1x128xf32, #tpu.memory_space<vmem>>, vector<1x128xf32>
    %16 = vector.broadcast %15 : vector<1x128xf32> to vector<16x128xf32>
    %17 = arith.addf %14, %16 : vector<16x128xf32>
    %cst_16 = arith.constant dense<0.000000e+00> : vector<16x16xf32>
    %18 = tpu.matmul %7, %12, %cst_16 {dimension_numbers = #tpu.dot_dimension_numbers<[1], [1], [0], [0], [0, 0, 1, 0], [], []>} : vector<16x128xf32>, vector<16x128xf32>, vector<16x16xf32> -> vector<16x16xf32>
    %cst_17 = arith.constant dense<0xFF800000> : vector<16xf32>
    %19 = vector.multi_reduction <maximumf>, %18, %cst_17 [1] : vector<16x16xf32> to vector<16xf32>
    %20 = vector.shape_cast %19 : vector<16xf32> to vector<16x1xf32>
    %21 = vector.broadcast %20 : vector<16x1xf32> to vector<16x16xf32>
    %22 = arith.subf %18, %21 : vector<16x16xf32>
    %23 = math.exp %22 : vector<16x16xf32>
    %cst_18 = arith.constant dense<0.000000e+00> : vector<16xf32>
    %24 = vector.multi_reduction <add>, %23, %cst_18 [1] : vector<16x16xf32> to vector<16xf32>
    %25 = vector.shape_cast %24 : vector<16xf32> to vector<16x1xf32>
    %26 = tpu.reciprocal %25 {approx = true} : vector<16x1xf32> -> vector<16x1xf32>
    %27 = vector.broadcast %26 : vector<16x1xf32> to vector<16x16xf32>
    %28 = arith.mulf %23, %27 : vector<16x16xf32>
    %cst_19 = arith.constant dense<0.000000e+00> : vector<16x128xf32>
    %29 = tpu.matmul %28, %17, %cst_19 {dimension_numbers = #tpu.dot_dimension_numbers<[1], [0], [0], [1], [0, 0, 1, 1], [], []>} : vector<16x16xf32>, vector<16x128xf32>, vector<16x128xf32> -> vector<16x128xf32>
    %30 = arith.truncf %29 : vector<16x128xf32> to vector<16x128xbf16>
    %c0_20 = arith.constant 0 : index
    %c0_21 = arith.constant 0 : index
    %31 = vector.load %arg8[%c0_20, %c0_21] : memref<128x256xbf16, #tpu.memory_space<vmem>>, vector<128x256xbf16>
    %cst_22 = arith.constant dense<0.000000e+00> : vector<16x256xf32>
    %32 = tpu.matmul %30, %31, %cst_22 {dimension_numbers = #tpu.dot_dimension_numbers<[1], [0], [0], [1], [0, 0, 1, 1], [], []>} : vector<16x128xbf16>, vector<128x256xbf16>, vector<16x256xf32> -> vector<16x256xf32>
    %c0_23 = arith.constant 0 : index
    %c0_24 = arith.constant 0 : index
    %33 = vector.load %arg9[%c0_23, %c0_24] : memref<1x256xf32, #tpu.memory_space<vmem>>, vector<1x256xf32>
    %34 = vector.broadcast %33 : vector<1x256xf32> to vector<16x256xf32>
    %35 = arith.addf %32, %34 : vector<16x256xf32>
    %c0_25 = arith.constant 0 : index
    %c0_26 = arith.constant 0 : index
    %c0_27 = arith.constant 0 : index
    %36 = vector.load %arg10[%c0_25, %c0_26, %c0_27] : memref<1x16x256xf32, #tpu.memory_space<vmem>>, vector<1x16x256xf32>
    %37 = vector.shape_cast %36 : vector<1x16x256xf32> to vector<16x256xf32>
    %38 = vector.shape_cast %35 : vector<16x256xf32> to vector<1x16x256xf32>
    tpu.vector_store %arg10[%c0_25, %c0_26, %c0_27], %38 {strides = array<i32>} : memref<1x16x256xf32, #tpu.memory_space<vmem>>, vector<1x16x256xf32>,
    return
  }
  func.func @transform_0(%arg0: i32) -> (i32, i32, i32) {
    %c0_i32 = arith.constant 0 : i32
    %c0_i32_0 = arith.constant 0 : i32
    %c0_i32_1 = arith.constant 0 : i32
    return %arg0, %c0_i32, %c0_i32_0 : i32, i32, i32
  }
  func.func @transform_1(%arg0: i32) -> (i32, i32) {
    %c0_i32 = arith.constant 0 : i32
    %c0_i32_0 = arith.constant 0 : i32
    %c0_i32_1 = arith.constant 0 : i32
    return %c0_i32, %c0_i32_0 : i32, i32
  }
  func.func @transform_2(%arg0: i32) -> (i32, i32) {
    %c0_i32 = arith.constant 0 : i32
    %c0_i32_0 = arith.constant 0 : i32
    %c0_i32_1 = arith.constant 0 : i32
    return %c0_i32, %c0_i32_0 : i32, i32
  }
  func.func @transform_3(%arg0: i32) -> (i32, i32) {
    %c0_i32 = arith.constant 0 : i32
    %c0_i32_0 = arith.constant 0 : i32
    %c0_i32_1 = arith.constant 0 : i32
    return %c0_i32, %c0_i32_0 : i32, i32
  }
  func.func @transform_4(%arg0: i32) -> (i32, i32) {
    %c0_i32 = arith.constant 0 : i32
    %c0_i32_0 = arith.constant 0 : i32
    %c0_i32_1 = arith.constant 0 : i32
    return %c0_i32, %c0_i32_0 : i32, i32
  }
  func.func @transform_5(%arg0: i32) -> (i32, i32) {
    %c0_i32 = arith.constant 0 : i32
    %c0_i32_0 = arith.constant 0 : i32
    %c0_i32_1 = arith.constant 0 : i32
    return %c0_i32, %c0_i32_0 : i32, i32
  }
  func.func @transform_6(%arg0: i32) -> (i32, i32) {
    %c0_i32 = arith.constant 0 : i32
    %c0_i32_0 = arith.constant 0 : i32
    %c0_i32_1 = arith.constant 0 : i32
    return %c0_i32, %c0_i32_0 : i32, i32
  }
  func.func @transform_7(%arg0: i32) -> (i32, i32) {
    %c0_i32 = arith.constant 0 : i32
    %c0_i32_0 = arith.constant 0 : i32
    %c0_i32_1 = arith.constant 0 : i32
    return %c0_i32, %c0_i32_0 : i32, i32
  }
  func.func @transform_8(%arg0: i32) -> (i32, i32) {
    %c0_i32 = arith.constant 0 : i32
    %c0_i32_0 = arith.constant 0 : i32
    %c0_i32_1 = arith.constant 0 : i32
    return %c0_i32, %c0_i32_0 : i32, i32
  }
  func.func @transform_9(%arg0: i32) -> (i32, i32, i32) {
    %c0_i32 = arith.constant 0 : i32
    %c0_i32_0 = arith.constant 0 : i32
    %c0_i32_1 = arith.constant 0 : i32
    return %arg0, %c0_i32, %c0_i32_0 : i32, i32, i32
  }
}

</mosaic_0001>

<llo_original>
// kernel: tpu_custom_call.1
$region0: #{tpu_custom_call.1}
  #allocation0 [shape = 'u32[]', space=smem, size = 0x4, offset = 0x4, fixed_abs, tag = 'smem constant byte address 0x4 - core index']
  #allocation1 [shape = 'u32[144,128]{1,0:T(1,128)}', space=vmem, size = 0x12000, scoped, tag = 'internal scratch']
  %s0 = inlined_call_operand.hbm [shape: f32[2,16,64], index: 0, kind: input, shape index: {}]
  %s1 = inlined_call_operand.hbm [shape: bf16[64,128], index: 1, kind: input, shape index: {}]
  %s2 = inlined_call_operand.vmem [shape: f32[1,128], index: 2, kind: input, shape index: {}]
  %s3 = inlined_call_operand.hbm [shape: bf16[64,128], index: 3, kind: input, shape index: {}]
  %s4 = inlined_call_operand.vmem [shape: f32[1,128], index: 4, kind: input, shape index: {}]
  %s5 = inlined_call_operand.hbm [shape: bf16[64,128], index: 5, kind: input, shape index: {}]
  %s6 = inlined_call_operand.vmem [shape: f32[1,128], index: 6, kind: input, shape index: {}]
  %s7 = inlined_call_operand.hbm [shape: bf16[128,256], index: 7, kind: input, shape index: {}]
  %s8 = inlined_call_operand.vmem [shape: f32[1,256], index: 8, kind: input, shape index: {}]
  %s9 = inlined_call_operand.hbm [shape: f32[2,16,256], index: 9, kind: output, shape index: {}]
  %s10 = sld [smem:[#allocation0]]
  $region89: #{tpu_custom_call.1} parent=0
    _
  %s12 = ssub.s32 1, %s10
  %s13 = scalar_select 0, %s12, %s10
  $region1: #{tpu_custom_call.1} parent=0
    #allocation2 [shape = 'u8[16384]{0}', space=vmem, size = 0x4000, scoped, tag = 'input window, operand 0']
    #allocation3 [shape = 's32[2]{0}', space=sflag, size = 0x8, scoped, tag = 'scoped memory for tpu_custom_call.1']
    #allocation4 [shape = 's32[2]{0}', space=sflag, size = 0x8, scoped, tag = 'scoped memory for tpu_custom_call.1']
    #allocation5 [shape = 'u8[16384]{0}', space=vmem, size = 0x4000, scoped, tag = 'input window, operand 1, single buffered']
    #allocation6 [shape = 's32[1]{0}', space=sflag, size = 0x4, scoped, tag = 'scoped memory for tpu_custom_call.1']
    #allocation7 [shape = 'u8[16384]{0}', space=vmem, size = 0x4000, scoped, tag = 'input window, operand 3, single buffered']
    #allocation8 [shape = 'u8[16384]{0}', space=vmem, size = 0x4000, scoped, tag = 'input window, operand 5, single buffered']
    #allocation9 [shape = 's32[1]{0}', space=sflag, size = 0x4, scoped, tag = 'scoped memory for tpu_custom_call.1']
    #allocation10 [shape = 'u8[65536]{0}', space=vmem, size = 0x10000, scoped, tag = 'input window, operand 7, single buffered']
    #allocation11 [shape = 'u8[32768]{0}', space=vmem, size = 0x8000, scoped, tag = 'output window, operand 0']
    %14 = vsyncpa [#allocation3], 0
    %s15 = scalar_lea.sflag [#allocation3], 1
    %16 = vsyncpa %s15, 0
    %17 = vsyncpa [#allocation6], 0
    %18 = vsyncpa [#allocation9], 0
    %19 = vsyncpa [#allocation4], 0
    %s20 = scalar_lea.sflag [#allocation4], 1
    %21 = vsyncpa %s20, 0
    loop: start=0, step=1, limit=4
    $region2: #{tpu_custom_call.1} parent=1 // loop_pre_header
      _
    $region3: #{tpu_custom_call.1} parent=1 // loop_header
      %s23 = sphi 0, %s27
      %p24 = scmp.ge.s32.totalorder %s23, 4
      %s33 = sphi 0, %s35
      %s36 = sphi 0, %s33
      %s37 = sphi 0, %s36
      %s53 = sphi 0, %s37
      %s57 = sphi 0, %s57
      %s59 = sphi 0, %s57
      %s60 = sphi 0, %s59
      %s74 = sphi 0, %s60
      %s78 = sphi 0, %s78
      %s80 = sphi 0, %s78
      %s81 = sphi 0, %s80
      %s95 = sphi 0, %s81
      %s99 = sphi 0, %s99
      %s101 = sphi 0, %s99
      %s102 = sphi 0, %s101
      %s116 = sphi 0, %s102
      %s120 = sphi 0, %s120
      %s122 = sphi 0, %s120
      %s123 = sphi 0, %s122
      %s137 = sphi 0, %s123
      %s141 = sphi 0, %s141
      %s143 = sphi 0, %s141
      %s144 = sphi 0, %s143
      %s158 = sphi 0, %s144
      %s162 = sphi 0, %s162
      %s164 = sphi 0, %s162
      %s165 = sphi 0, %s164
      %s179 = sphi 0, %s165
      %s183 = sphi 0, %s183
      %s185 = sphi 0, %s183
      %s186 = sphi 0, %s185
      %s200 = sphi 0, %s186
      %s204 = sphi 0, %s204
      %s206 = sphi 0, %s204
      %s207 = sphi 0, %s206
      %s221 = sphi 0, %s207
      %s227 = sphi 0, %s229
      %s230 = sphi 0, %s227
      %s231 = sphi 0, %s230
      %s247 = sphi 0, %s231
    $region4: #{tpu_custom_call.1} parent=1 // loop_header_branch
      %26 = sbr.rel (%p24) target = $region8
    $region5: #{tpu_custom_call.1} parent=1 // loop_body
      %s28 = ssub.s32 %s23, 1
      %s29 = ssub.s32 %s23, 2
      %s30 = sadd.s32 %s23, 1
      %s31 = ssub.s32 %s23, %s30
      %p32 = scmp.eq.s32.totalorder %s31, 0
      %s34 = sadd.s32 %s33, 1
      %s35 = scalar_select %p32, %s33, %s34
      %p38 = pneg %p32
      %p39 = scmp.eq.s32.totalorder %s23, 1
      %p40 = por %p38, %p39
      %p41 = scmp.ne.s32.totalorder %s33, %s36
      %p42 = scmp.eq.s32.totalorder %s23, 0
      %p43 = por %p41, %p42
      %p44 = scmp.ne.s32.totalorder %s33, %s36
      %p45 = scmp.eq.s32.totalorder %s28, 1
      %p46 = por %p44, %p45
      %p47 = scmp.ne.s32.totalorder %s36, %s37
      %p48 = scmp.eq.s32.totalorder %s28, 0
      %p49 = por %p47, %p48
      %p50 = scmp.ne.s32.totalorder %s36, %s37
      %p51 = scmp.eq.s32.totalorder %s29, 1
      %p52 = por %p50, %p51
      %p54 = scmp.ne.s32.totalorder %s37, %s53
      %p55 = scmp.eq.s32.totalorder %s29, 0
      %p56 = por %p54, %p55
      %s58 = sadd.s32 %s57, 1
      %p61 = scmp.eq.s32.totalorder %s23, 1
      %p62 = scmp.ne.s32.totalorder %s57, %s59
      %p63 = scmp.eq.s32.totalorder %s23, 0
      %p64 = por %p62, %p63
      %p65 = scmp.ne.s32.totalorder %s57, %s59
      %p66 = scmp.eq.s32.totalorder %s28, 1
      %p67 = por %p65, %p66
      %p68 = scmp.ne.s32.totalorder %s59, %s60
      %p69 = scmp.eq.s32.totalorder %s28, 0
      %p70 = por %p68, %p69
      %p71 = scmp.ne.s32.totalorder %s59, %s60
      %p72 = scmp.eq.s32.totalorder %s29, 1
      %p73 = por %p71, %p72
      %p75 = scmp.ne.s32.totalorder %s60, %s74
      %p76 = scmp.eq.s32.totalorder %s29, 0
      %p77 = por %p75, %p76
      %s79 = sadd.s32 %s78, 1
      %p82 = scmp.eq.s32.totalorder %s23, 1
      %p83 = scmp.ne.s32.totalorder %s78, %s80
      %p84 = scmp.eq.s32.totalorder %s23, 0
      %p85 = por %p83, %p84
      %p86 = scmp.ne.s32.totalorder %s78, %s80
      %p87 = scmp.eq.s32.totalorder %s28, 1
      %p88 = por %p86, %p87
      %p89 = scmp.ne.s32.totalorder %s80, %s81
      %p90 = scmp.eq.s32.totalorder %s28, 0
      %p91 = por %p89, %p90
      %p92 = scmp.ne.s32.totalorder %s80, %s81
      %p93 = scmp.eq.s32.totalorder %s29, 1
      %p94 = por %p92, %p93
      %p96 = scmp.ne.s32.totalorder %s81, %s95
      %p97 = scmp.eq.s32.totalorder %s29, 0
      %p98 = por %p96, %p97
      %s100 = sadd.s32 %s99, 1
      %p103 = scmp.eq.s32.totalorder %s23, 1
      %p104 = scmp.ne.s32.totalorder %s99, %s101
      %p105 = scmp.eq.s32.totalorder %s23, 0
      %p106 = por %p104, %p105
      %p107 = scmp.ne.s32.totalorder %s99, %s101
      %p108 = scmp.eq.s32.totalorder %s28, 1
      %p109 = por %p107, %p108
      %p110 = scmp.ne.s32.totalorder %s101, %s102
      %p111 = scmp.eq.s32.totalorder %s28, 0
      %p112 = por %p110, %p111
      %p113 = scmp.ne.s32.totalorder %s101, %s102
      %p114 = scmp.eq.s32.totalorder %s29, 1
      %p115 = por %p113, %p114
      %p117 = scmp.ne.s32.totalorder %s102, %s116
      %p118 = scmp.eq.s32.totalorder %s29, 0
      %p119 = por %p117, %p118
      %s121 = sadd.s32 %s120, 1
      %p124 = scmp.eq.s32.totalorder %s23, 1
      %p125 = scmp.ne.s32.totalorder %s120, %s122
      %p126 = scmp.eq.s32.totalorder %s23, 0
      %p127 = por %p125, %p126
      %p128 = scmp.ne.s32.totalorder %s120, %s122
      %p129 = scmp.eq.s32.totalorder %s28, 1
      %p130 = por %p128, %p129
      %p131 = scmp.ne.s32.totalorder %s122, %s123
      %p132 = scmp.eq.s32.totalorder %s28, 0
      %p133 = por %p131, %p132
      %p134 = scmp.ne.s32.totalorder %s122, %s123
      %p135 = scmp.eq.s32.totalorder %s29, 1
      %p136 = por %p134, %p135
      %p138 = scmp.ne.s32.totalorder %s123, %s137
      %p139 = scmp.eq.s32.totalorder %s29, 0
      %p140 = por %p138, %p139
      %s142 = sadd.s32 %s141, 1
      %p145 = scmp.eq.s32.totalorder %s23, 1
      %p146 = scmp.ne.s32.totalorder %s141, %s143
      %p147 = scmp.eq.s32.totalorder %s23, 0
      %p148 = por %p146, %p147
      %p149 = scmp.ne.s32.totalorder %s141, %s143
      %p150 = scmp.eq.s32.totalorder %s28, 1
      %p151 = por %p149, %p150
      %p152 = scmp.ne.s32.totalorder %s143, %s144
      %p153 = scmp.eq.s32.totalorder %s28, 0
      %p154 = por %p152, %p153
      %p155 = scmp.ne.s32.totalorder %s143, %s144
      %p156 = scmp.eq.s32.totalorder %s29, 1
      %p157 = por %p155, %p156
      %p159 = scmp.ne.s32.totalorder %s144, %s158
      %p160 = scmp.eq.s32.totalorder %s29, 0
      %p161 = por %p159, %p160
      %s163 = sadd.s32 %s162, 1
      %p166 = scmp.eq.s32.totalorder %s23, 1
      %p167 = scmp.ne.s32.totalorder %s162, %s164
      %p168 = scmp.eq.s32.totalorder %s23, 0
      %p169 = por %p167, %p168
      %p170 = scmp.ne.s32.totalorder %s162, %s164
      %p171 = scmp.eq.s32.totalorder %s28, 1
      %p172 = por %p170, %p171
      %p173 = scmp.ne.s32.totalorder %s164, %s165
      %p174 = scmp.eq.s32.totalorder %s28, 0
      %p175 = por %p173, %p174
      %p176 = scmp.ne.s32.totalorder %s164, %s165
      %p177 = scmp.eq.s32.totalorder %s29, 1
      %p178 = por %p176, %p177
      %p180 = scmp.ne.s32.totalorder %s165, %s179
      %p181 = scmp.eq.s32.totalorder %s29, 0
      %p182 = por %p180, %p181
      %s184 = sadd.s32 %s183, 1
      %p187 = scmp.eq.s32.totalorder %s23, 1
      %p188 = scmp.ne.s32.totalorder %s183, %s185
      %p189 = scmp.eq.s32.totalorder %s23, 0
      %p190 = por %p188, %p189
      %p191 = scmp.ne.s32.totalorder %s183, %s185
      %p192 = scmp.eq.s32.totalorder %s28, 1
      %p193 = por %p191, %p192
      %p194 = scmp.ne.s32.totalorder %s185, %s186
      %p195 = scmp.eq.s32.totalorder %s28, 0
      %p196 = por %p194, %p195
      %p197 = scmp.ne.s32.totalorder %s185, %s186
      %p198 = scmp.eq.s32.totalorder %s29, 1
      %p199 = por %p197, %p198
      %p201 = scmp.ne.s32.totalorder %s186, %s200
      %p202 = scmp.eq.s32.totalorder %s29, 0
      %p203 = por %p201, %p202
      %s205 = sadd.s32 %s204, 1
      %p208 = scmp.eq.s32.totalorder %s23, 1
      %p209 = scmp.ne.s32.totalorder %s204, %s206
      %p210 = scmp.eq.s32.totalorder %s23, 0
      %p211 = por %p209, %p210
      %p212 = scmp.ne.s32.totalorder %s204, %s206
      %p213 = scmp.eq.s32.totalorder %s28, 1
      %p214 = por %p212, %p213
      %p215 = scmp.ne.s32.totalorder %s206, %s207
      %p216 = scmp.eq.s32.totalorder %s28, 0
      %p217 = por %p215, %p216
      %p218 = scmp.ne.s32.totalorder %s206, %s207
      %p219 = scmp.eq.s32.totalorder %s29, 1
      %p220 = por %p218, %p219
      %p222 = scmp.ne.s32.totalorder %s207, %s221
      %p223 = scmp.eq.s32.totalorder %s29, 0
      %p224 = por %p222, %p223
      %s225 = ssub.s32 %s23, %s30
      %p226 = scmp.eq.s32.totalorder %s225, 0
      %s228 = sadd.s32 %s227, 1
      %s229 = scalar_select %p226, %s227, %s228
      %p232 = pneg %p226
      %p233 = scmp.eq.s32.totalorder %s23, 1
      %p234 = por %p232, %p233
      %p235 = scmp.ne.s32.totalorder %s227, %s230
      %p236 = scmp.eq.s32.totalorder %s23, 0
      %p237 = por %p235, %p236
      %p238 = scmp.ne.s32.totalorder %s227, %s230
      %p239 = scmp.eq.s32.totalorder %s28, 1
      %p240 = por %p238, %p239
      %p241 = scmp.ne.s32.totalorder %s230, %s231
      %p242 = scmp.eq.s32.totalorder %s28, 0
      %p243 = por %p241, %p242
      %p244 = scmp.ne.s32.totalorder %s230, %s231
      %p245 = scmp.eq.s32.totalorder %s29, 1
      %p246 = por %p244, %p245
      %p248 = scmp.ne.s32.totalorder %s231, %s247
      %p249 = scmp.eq.s32.totalorder %s29, 0
      %p250 = por %p248, %p249
      %p251 = scmp.le.s32.totalorder 1, %s23
      %p252 = scmp.lt.s32.totalorder %s23, 3
      %p253 = pnand %p251, %p252
      %p254 = pneg %p253
      // Predicated region
      $region9: #{tpu_custom_call.1} parent=5 // pred_check
        _
      $region10: #{tpu_custom_call.1} parent=5 // pred_check_branch
        %256 = sbr.rel (%p253) target = $region12
      $region11: #{tpu_custom_call.1} parent=5 // pred_region
        %s257 = ssub.s32 %s23, 1
        // Predicated region
        $region13: #{tpu_custom_call.1} parent=11 // pred_check
          %p258 = pneg %p70
        $region14: #{tpu_custom_call.1} parent=11 // pred_check_branch
          %260 = sbr.rel (%p258) target = $region16
        $region15: #{tpu_custom_call.1} parent=11 // pred_region
          %s262 = ssub.s32 512, 512
          %263 = vsyncadd [#allocation6], %s262
          %s264 = sshll.u32 [#allocation5], 4
          %s265 = int_to_ptr.vmem [resolvable:$true] %s264
          %270 = dma.hbm_to_vmem [thread:$0]  %s1, 512, %s265, [#allocation6], 64, 64, 4
        $region16: #{tpu_custom_call.1} parent=11 // pred_fallthru
          _
        // Predicated region
        $region17: #{tpu_custom_call.1} parent=11 // pred_check
          %p271 = pneg %p91
        $region18: #{tpu_custom_call.1} parent=11 // pred_check_branch
          %273 = sbr.rel (%p271) target = $region20
        $region19: #{tpu_custom_call.1} parent=11 // pred_region
          _
        $region20: #{tpu_custom_call.1} parent=11 // pred_fallthru
          _
        // Predicated region
        $region21: #{tpu_custom_call.1} parent=11 // pred_check
          %p274 = pneg %p112
        $region22: #{tpu_custom_call.1} parent=11 // pred_check_branch
          %276 = sbr.rel (%p274) target = $region24
        $region23: #{tpu_custom_call.1} parent=11 // pred_region
          %s278 = ssub.s32 512, 512
          %279 = vsyncadd [#allocation6], %s278
          %s280 = sshll.u32 [#allocation7], 4
          %s281 = int_to_ptr.vmem [resolvable:$true] %s280
          %286 = dma.hbm_to_vmem [thread:$0]  %s3, 512, %s281, [#allocation6], 64, 64, 4
        $region24: #{tpu_custom_call.1} parent=11 // pred_fallthru
          _
        // Predicated region
        $region25: #{tpu_custom_call.1} parent=11 // pred_check
          %p287 = pneg %p133
        $region26: #{tpu_custom_call.1} parent=11 // pred_check_branch
          %289 = sbr.rel (%p287) target = $region28
        $region27: #{tpu_custom_call.1} parent=11 // pred_region
          _
        $region28: #{tpu_custom_call.1} parent=11 // pred_fallthru
          _
        // Predicated region
        $region29: #{tpu_custom_call.1} parent=11 // pred_check
          %p290 = pneg %p154
        $region30: #{tpu_custom_call.1} parent=11 // pred_check_branch
          %292 = sbr.rel (%p290) target = $region32
        $region31: #{tpu_custom_call.1} parent=11 // pred_region
          %s294 = ssub.s32 512, 512
          %295 = vsyncadd [#allocation9], %s294
          %s296 = sshll.u32 [#allocation8], 4
          %s297 = int_to_ptr.vmem [resolvable:$true] %s296
          %302 = dma.hbm_to_vmem [thread:$0]  %s5, 512, %s297, [#allocation9], 64, 64, 4
        $region32: #{tpu_custom_call.1} parent=11 // pred_fallthru
          _
        // Predicated region
        $region33: #{tpu_custom_call.1} parent=11 // pred_check
          %p303 = pneg %p175
        $region34: #{tpu_custom_call.1} parent=11 // pred_check_branch
          %305 = sbr.rel (%p303) target = $region36
        $region35: #{tpu_custom_call.1} parent=11 // pred_region
          _
        $region36: #{tpu_custom_call.1} parent=11 // pred_fallthru
          _
        // Predicated region
        $region37: #{tpu_custom_call.1} parent=11 // pred_check
          %p306 = pneg %p196
        $region38: #{tpu_custom_call.1} parent=11 // pred_check_branch
          %308 = sbr.rel (%p306) target = $region40
        $region39: #{tpu_custom_call.1} parent=11 // pred_region
          %s310 = ssub.s32 2048, 2048
          %311 = vsyncadd [#allocation9], %s310
          %s312 = sshll.u32 [#allocation10], 4
          %s313 = int_to_ptr.vmem [resolvable:$true] %s312
          %318 = dma.hbm_to_vmem [thread:$0]  %s7, 2048, %s313, [#allocation9], 128, 128, 8
        $region40: #{tpu_custom_call.1} parent=11 // pred_fallthru
          _
        // Predicated region
        $region41: #{tpu_custom_call.1} parent=11 // pred_check
          %p319 = pneg %p217
        $region42: #{tpu_custom_call.1} parent=11 // pred_check_branch
          %321 = sbr.rel (%p319) target = $region44
        $region43: #{tpu_custom_call.1} parent=11 // pred_region
          _
        $region44: #{tpu_custom_call.1} parent=11 // pred_fallthru
          _
      $region12: #{tpu_custom_call.1} parent=5 // pred_fallthru
        _
      %p322 = scmp.lt.s32.totalorder %s23, 2
      // Predicated region
      $region45: #{tpu_custom_call.1} parent=5 // pred_check
        %p323 = pneg %p322
      $region46: #{tpu_custom_call.1} parent=5 // pred_check_branch
        %325 = sbr.rel (%p323) target = $region48
      $region47: #{tpu_custom_call.1} parent=5 // pred_region
        // Predicated region
        $region49: #{tpu_custom_call.1} parent=47 // pred_check
          %p326 = pneg %p43
        $region50: #{tpu_custom_call.1} parent=47 // pred_check_branch
          %328 = sbr.rel (%p326) target = $region52
        $region51: #{tpu_custom_call.1} parent=47 // pred_region
          %s329 = sand.u32 %s33, 1
          %s330 = scalar_lea.sflag [#allocation3], %s329
          %s331 = sand.u32 %s33, 1
          %s332 = smul.addr %s331, 16
          %s333 = scalar_lea.vmem [#allocation2], %s332
          %s335 = ssub.s32 256, 256
          %336 = vsyncadd %s330, %s335
          %s337 = smul.addr %s23, 2
          %s338 = smul.addr %s337, 128
          %s339 = scalar_lea.hbm %s0, %s338
          %s340 = sshll.u32 %s333, 4
          %s341 = int_to_ptr.vmem [resolvable:$true] %s340
          %346 = dma.hbm_to_vmem [thread:$0]  %s339, 256, %s341, %s330, 128, 128, 8
        $region52: #{tpu_custom_call.1} parent=47 // pred_fallthru
          _
      $region48: #{tpu_custom_call.1} parent=5 // pred_fallthru
        _
      %p347 = scmp.le.s32.totalorder 1, %s23
      %p348 = scmp.lt.s32.totalorder %s23, 3
      %p349 = pnand %p347, %p348
      %p350 = pneg %p349
      // Predicated region
      $region53: #{tpu_custom_call.1} parent=5 // pred_check
        _
      $region54: #{tpu_custom_call.1} parent=5 // pred_check_branch
        %352 = sbr.rel (%p349) target = $region56
      $region55: #{tpu_custom_call.1} parent=5 // pred_region
        %s353 = ssub.s32 %s23, 1
        %s354 = sand.u32 %s36, 1
        %s355 = scalar_lea.sflag [#allocation3], %s354
        %s356 = sand.u32 %s36, 1
        %s357 = smul.addr %s356, 16
        %s358 = scalar_lea.vmem [#allocation2], %s357
        // Predicated region
        $region57: #{tpu_custom_call.1} parent=55 // pred_check
          %p359 = pneg %p49
        $region58: #{tpu_custom_call.1} parent=55 // pred_check_branch
          %361 = sbr.rel (%p359) target = $region60
        $region59: #{tpu_custom_call.1} parent=55 // pred_region
          %362 = dma.done %s355, 256
        $region60: #{tpu_custom_call.1} parent=55 // pred_fallthru
          _
        // Predicated region
        $region61: #{tpu_custom_call.1} parent=55 // pred_check
          %p363 = pneg %p70
        $region62: #{tpu_custom_call.1} parent=55 // pred_check_branch
          %365 = sbr.rel (%p363) target = $region64
        $region63: #{tpu_custom_call.1} parent=55 // pred_region
          %366 = dma.done [#allocation6], 512
        $region64: #{tpu_custom_call.1} parent=55 // pred_fallthru
          _
        // Predicated region
        $region65: #{tpu_custom_call.1} parent=55 // pred_check
          %p367 = pneg %p112
        $region66: #{tpu_custom_call.1} parent=55 // pred_check_branch
          %369 = sbr.rel (%p367) target = $region68
        $region67: #{tpu_custom_call.1} parent=55 // pred_region
          %370 = dma.done [#allocation6], 512
        $region68: #{tpu_custom_call.1} parent=55 // pred_fallthru
          _
        // Predicated region
        $region69: #{tpu_custom_call.1} parent=55 // pred_check
          %p371 = pneg %p154
        $region70: #{tpu_custom_call.1} parent=55 // pred_check_branch
          %373 = sbr.rel (%p371) target = $region72
        $region71: #{tpu_custom_call.1} parent=55 // pred_region
          %374 = dma.done [#allocation9], 512
        $region72: #{tpu_custom_call.1} parent=55 // pred_fallthru
          _
        // Predicated region
        $region73: #{tpu_custom_call.1} parent=55 // pred_check
          %p375 = pneg %p196
        $region74: #{tpu_custom_call.1} parent=55 // pred_check_branch
          %377 = sbr.rel (%p375) target = $region76
        $region75: #{tpu_custom_call.1} parent=55 // pred_region
          %378 = dma.done [#allocation9], 2048
        $region76: #{tpu_custom_call.1} parent=55 // pred_fallthru
          _
        %s379 = sand.u32 %s36, 1
        %s380 = scalar_lea.sflag [#allocation3], %s379
        %s381 = sand.u32 %s36, 1
        %s382 = smul.addr %s381, 16
        %s383 = scalar_lea.vmem [#allocation2], %s382
        %p384 = pneg %p49
        %p385 = pneg %p46
        %p386 = pneg %p70
        %p387 = pneg %p67
        %p388 = pneg %p91
        %p389 = pneg %p88
        %p390 = pneg %p112
        %p391 = pneg %p109
        %p392 = pneg %p133
        %p393 = pneg %p130
        %p394 = pneg %p154
        %p395 = pneg %p151
        %p396 = pneg %p175
        %p397 = pneg %p172
        %p398 = pneg %p196
        %p399 = pneg %p193
        %p400 = pneg %p217
        %p401 = pneg %p214
        %p402 = pneg %p243
        %p403 = pneg %p240
        %s404 = sand.u32 %s230, 1
        %s405 = scalar_lea.sflag [#allocation4], %s404
        %s406 = sand.u32 %s230, 1
        %s407 = smul.addr %s406, 32
        %s408 = scalar_lea.vmem [#allocation11], %s407
        %v410 = vld [vmem:[%s358] sm:$0xff]
        %v411 = vld [vmem:[%s358 + $0x8] sm:$0xff]
        %v412 = vpack.c.bf16 %v411, %v410
        %v413 = vld [vmem:[#allocation5] sm:$0xf]
        %v414 = vld [vmem:[#allocation5 + $0x4] sm:$0xf]
        %v415 = vld [vmem:[#allocation5 + $0x8] sm:$0xf]
        %v416 = vld [vmem:[#allocation5 + $0xc] sm:$0xf]
        %v417 = vld [vmem:[#allocation5 + $0x10] sm:$0xf]
        %v418 = vld [vmem:[#allocation5 + $0x14] sm:$0xf]
        %v419 = vld [vmem:[#allocation5 + $0x18] sm:$0xf]
        %v420 = vld [vmem:[#allocation5 + $0x1c] sm:$0xf]
        %v421 = vld [vmem:[%s2] sm:$0x1]
        %v423 = vlaneseq
        %v424 = vshrl.u32 %v423, 7
        %v425 = vsub.s32 0, %v424
        %v426 = vrot.slane %v421, %v425
        %v436 = vunpack.c.l.b16 %v413
        %v437 = vunpack.c.l.b16 %v414
        %v438 = vunpack.c.l.b16 %v415
        %v439 = vunpack.c.l.b16 %v416
        %v440 = vunpack.c.l.b16 %v417
        %v441 = vunpack.c.l.b16 %v418
        %v442 = vunpack.c.l.b16 %v419
        %v443 = vunpack.c.l.b16 %v420
        %v444 = vpack.c.b16 %v437, %v436
        %v445 = vpack.c.b16 %v439, %v438
        %v446 = vpack.c.b16 %v441, %v440
        %v447 = vpack.c.b16 %v443, %v442
        %vm452 = vcmask 523264
        %v454 = vsel %vm452, %v412, 0
        %456 = vmatprep.subr.bf16.mxu0 0
        %457 = vmatpush1.bf16.msra.mxu0 0
        %458 = vmatprep.subr.bf16.mxu0 0
        %459 = vmatpush1.bf16.msra.mxu0 0
        %460 = vmatprep.subr.bf16.mxu0 0
        %461 = vmatpush1.bf16.msra.mxu0 0
        %462 = vmatprep.subr.bf16.mxu0 0
        %463 = vmatpush1.bf16.msra.mxu0 0
        %464 = vmatprep.subr.bf16.mxu0 0
        %465 = vmatpush1.bf16.msra.mxu0 %v447
        %466 = vmatprep.subr.bf16.mxu0 0
        %467 = vmatpush1.bf16.msra.mxu0 %v446
        %468 = vmatprep.subr.bf16.mxu0 0
        %469 = vmatpush1.bf16.msra.mxu0 %v445
        %470 = vmatprep.subr.bf16.mxu0 0
        %471 = vmatpush1.bf16.msra.mxu0 %v444
        %472 = vmatprep.subr.bf16.mxu0 0
        %473 = vmatpush2.bf16.msra.mxu0 0
        %474 = vmatprep.subr.bf16.mxu0 0
        %475 = vmatpush2.bf16.msra.mxu0 0
        %476 = vmatprep.subr.bf16.mxu0 0
        %477 = vmatpush2.bf16.msra.mxu0 0
        %478 = vmatprep.subr.bf16.mxu0 0
        %479 = vmatpush2.bf16.msra.mxu0 0
        %480 = vmatprep.subr.bf16.mxu0 0
        %481 = vmatpush2.bf16.msra.mxu0 0
        %482 = vmatprep.subr.bf16.mxu0 0
        %483 = vmatpush2.bf16.msra.mxu0 0
        %484 = vmatprep.subr.bf16.mxu0 0
        %485 = vmatpush2.bf16.msra.mxu0 0
        %486 = vmatprep.subr.bf16.mxu0 0
        %487 = vmatpush2.bf16.msra.mxu0 0
        %488 = vmatprep.mubr.bf16.mxu0 0
        %489 = vmatmul.mubr.bf16.gmra.mxu0 %v454
        %v490 = vpop.f32.mrf.mxu0
        %v491 = vadd.f32 %v426, %v490
        %v492 = vpop.f32.mrf.mxu0
        %v493 = vpop.f32.mrf.mxu0
        %v494 = vadd.f32 %v426, %v493
        %v495 = vpop.f32.mrf.mxu0
        %496 = vdwg.mxu0
        %v497 = vld [vmem:[#allocation7] sm:$0xf]
        %v498 = vld [vmem:[#allocation7 + $0x4] sm:$0xf]
        %v499 = vld [vmem:[#allocation7 + $0x8] sm:$0xf]
        %v500 = vld [vmem:[#allocation7 + $0xc] sm:$0xf]
        %v501 = vld [vmem:[#allocation7 + $0x10] sm:$0xf]
        %v502 = vld [vmem:[#allocation7 + $0x14] sm:$0xf]
        %v503 = vld [vmem:[#allocation7 + $0x18] sm:$0xf]
        %v504 = vld [vmem:[#allocation7 + $0x1c] sm:$0xf]
        %v505 = vld [vmem:[%s4] sm:$0x1]
        %v507 = vlaneseq
        %v508 = vshrl.u32 %v507, 7
        %v509 = vsub.s32 0, %v508
        %v510 = vrot.slane %v505, %v509
        %v520 = vunpack.c.l.b16 %v497
        %v521 = vunpack.c.l.b16 %v498
        %v522 = vunpack.c.l.b16 %v499
        %v523 = vunpack.c.l.b16 %v500
        %v524 = vunpack.c.l.b16 %v501
        %v525 = vunpack.c.l.b16 %v502
        %v526 = vunpack.c.l.b16 %v503
        %v527 = vunpack.c.l.b16 %v504
        %v528 = vpack.c.b16 %v521, %v520
        %v529 = vpack.c.b16 %v523, %v522
        %v530 = vpack.c.b16 %v525, %v524
        %v531 = vpack.c.b16 %v527, %v526
        %536 = vmatprep.subr.bf16.mxu0 0
        %537 = vmatpush1.bf16.msra.mxu0 0
        %538 = vmatprep.subr.bf16.mxu0 0
        %539 = vmatpush1.bf16.msra.mxu0 0
        %540 = vmatprep.subr.bf16.mxu0 0
        %541 = vmatpush1.bf16.msra.mxu0 0
        %542 = vmatprep.subr.bf16.mxu0 0
        %543 = vmatpush1.bf16.msra.mxu0 0
        %544 = vmatprep.subr.bf16.mxu0 0
        %545 = vmatpush1.bf16.msra.mxu0 %v531
        %546 = vmatprep.subr.bf16.mxu0 0
        %547 = vmatpush1.bf16.msra.mxu0 %v530
        %548 = vmatprep.subr.bf16.mxu0 0
        %549 = vmatpush1.bf16.msra.mxu0 %v529
        %550 = vmatprep.subr.bf16.mxu0 0
        %551 = vmatpush1.bf16.msra.mxu0 %v528
        %552 = vmatprep.subr.bf16.mxu0 0
        %553 = vmatpush2.bf16.msra.mxu0 0
        %554 = vmatprep.subr.bf16.mxu0 0
        %555 = vmatpush2.bf16.msra.mxu0 0
        %556 = vmatprep.subr.bf16.mxu0 0
        %557 = vmatpush2.bf16.msra.mxu0 0
        %558 = vmatprep.subr.bf16.mxu0 0
        %559 = vmatpush2.bf16.msra.mxu0 0
        %560 = vmatprep.subr.bf16.mxu0 0
        %561 = vmatpush2.bf16.msra.mxu0 0
        %562 = vmatprep.subr.bf16.mxu0 0
        %563 = vmatpush2.bf16.msra.mxu0 0
        %564 = vmatprep.subr.bf16.mxu0 0
        %565 = vmatpush2.bf16.msra.mxu0 0
        %566 = vmatprep.subr.bf16.mxu0 0
        %567 = vmatpush2.bf16.msra.mxu0 0
        %568 = vmatprep.mubr.bf16.mxu0 0
        %569 = vmatmul.mubr.bf16.gmra.mxu0 %v454
        %v570 = vpop.f32.mrf.mxu0
        %v571 = vadd.f32 %v510, %v570
        %v572 = vpop.f32.mrf.mxu0
        %v573 = vpop.f32.mrf.mxu0
        %v574 = vadd.f32 %v510, %v573
        %v575 = vpop.f32.mrf.mxu0
        %576 = vdwg.mxu0
        %v577 = vld [vmem:[#allocation8] sm:$0xf]
        %v578 = vld [vmem:[#allocation8 + $0x4] sm:$0xf]
        %v579 = vld [vmem:[#allocation8 + $0x8] sm:$0xf]
        %v580 = vld [vmem:[#allocation8 + $0xc] sm:$0xf]
        %v581 = vld [vmem:[#allocation8 + $0x10] sm:$0xf]
        %v582 = vld [vmem:[#allocation8 + $0x14] sm:$0xf]
        %v583 = vld [vmem:[#allocation8 + $0x18] sm:$0xf]
        %v584 = vld [vmem:[#allocation8 + $0x1c] sm:$0xf]
        %v585 = vld [vmem:[%s6] sm:$0x1]
        %v587 = vlaneseq
        %v588 = vshrl.u32 %v587, 7
        %v589 = vsub.s32 0, %v588
        %v590 = vrot.slane %v585, %v589
        %v600 = vunpack.c.l.b16 %v577
        %v601 = vunpack.c.l.b16 %v578
        %v602 = vunpack.c.l.b16 %v579
        %v603 = vunpack.c.l.b16 %v580
        %v604 = vunpack.c.l.b16 %v581
        %v605 = vunpack.c.l.b16 %v582
        %v606 = vunpack.c.l.b16 %v583
        %v607 = vunpack.c.l.b16 %v584
        %v608 = vpack.c.b16 %v601, %v600
        %v609 = vpack.c.b16 %v603, %v602
        %v610 = vpack.c.b16 %v605, %v604
        %v611 = vpack.c.b16 %v607, %v606
        %616 = vmatprep.subr.bf16.mxu0 0
        %617 = vmatpush1.bf16.msra.mxu0 0
        %618 = vmatprep.subr.bf16.mxu0 0
        %619 = vmatpush1.bf16.msra.mxu0 0
        %620 = vmatprep.subr.bf16.mxu0 0
        %621 = vmatpush1.bf16.msra.mxu0 0
        %622 = vmatprep.subr.bf16.mxu0 0
        %623 = vmatpush1.bf16.msra.mxu0 0
        %624 = vmatprep.subr.bf16.mxu0 0
        %625 = vmatpush1.bf16.msra.mxu0 %v611
        %626 = vmatprep.subr.bf16.mxu0 0
        %627 = vmatpush1.bf16.msra.mxu0 %v610
        %628 = vmatprep.subr.bf16.mxu0 0
        %629 = vmatpush1.bf16.msra.mxu0 %v609
        %630 = vmatprep.subr.bf16.mxu0 0
        %631 = vmatpush1.bf16.msra.mxu0 %v608
        %632 = vmatprep.subr.bf16.mxu0 0
        %633 = vmatpush2.bf16.msra.mxu0 0
        %634 = vmatprep.subr.bf16.mxu0 0
        %635 = vmatpush2.bf16.msra.mxu0 0
        %636 = vmatprep.subr.bf16.mxu0 0
        %637 = vmatpush2.bf16.msra.mxu0 0
        %638 = vmatprep.subr.bf16.mxu0 0
        %639 = vmatpush2.bf16.msra.mxu0 0
        %640 = vmatprep.subr.bf16.mxu0 0
        %641 = vmatpush2.bf16.msra.mxu0 0
        %642 = vmatprep.subr.bf16.mxu0 0
        %643 = vmatpush2.bf16.msra.mxu0 0
        %644 = vmatprep.subr.bf16.mxu0 0
        %645 = vmatpush2.bf16.msra.mxu0 0
        %646 = vmatprep.subr.bf16.mxu0 0
        %647 = vmatpush2.bf16.msra.mxu0 0
        %648 = vmatprep.mubr.bf16.mxu0 0
        %649 = vmatmul.mubr.bf16.gmra.mxu0 %v454
        %v650 = vpop.f32.mrf.mxu0
        %v651 = vadd.f32 %v590, %v650
        %v652 = vpop.f32.mrf.mxu0
        %v653 = vpop.f32.mrf.mxu0
        %v654 = vadd.f32 %v590, %v653
        %v655 = vpop.f32.mrf.mxu0
        %656 = vdwg.mxu0
        %657 = vmatprep.subr.mxu0 0.0
        %658 = vmatpush1.xpose.msra.mxu0 0.0
        %659 = vmatprep.subr.mxu0 0.0
        %660 = vmatpush1.xpose.msra.mxu0 0.0
        %661 = vmatprep.subr.mxu0 0.0
        %662 = vmatpush1.xpose.msra.mxu0 0.0
        %663 = vmatprep.subr.mxu0 0.0
        %664 = vmatpush1.xpose.msra.mxu0 0.0
        %665 = vmatprep.subr.mxu0 0.0
        %666 = vmatpush1.xpose.msra.mxu0 0.0
        %667 = vmatprep.subr.mxu0 0.0
        %668 = vmatpush1.xpose.msra.mxu0 0.0
        %669 = vmatprep.subr.mxu0 0.0
        %670 = vmatpush1.xpose.msra.mxu0 0.0
        %671 = vmatprep.subr.mxu0 0.0
        %672 = vmatpush1.xpose.msra.mxu0 0.0
        %673 = vmatprep.subr.mxu0 0.0
        %674 = vmatpush1.xpose.msra.mxu0 0.0
        %675 = vmatprep.subr.mxu0 0.0
        %676 = vmatpush1.xpose.msra.mxu0 0.0
        %677 = vmatprep.subr.mxu0 0.0
        %678 = vmatpush1.xpose.msra.mxu0 0.0
        %679 = vmatprep.subr.mxu0 0.0
        %680 = vmatpush1.xpose.msra.mxu0 0.0
        %681 = vmatprep.subr.mxu0 0.0
        %682 = vmatpush1.xpose.msra.mxu0 0.0
        %683 = vmatprep.subr.mxu0 0.0
        %684 = vmatpush1.xpose.msra.mxu0 0.0
        %685 = vmatprep.subr.mxu0 0.0
        %686 = vmatpush1.xpose.msra.mxu0 %v574
        %687 = vmatprep.subr.mxu0 0.0
        %688 = vmatpush1.xpose.msra.mxu0 %v571
        %689 = vmatprep.subr.mxu0 0.0
        %690 = vmatpush2.xpose.msra.mxu0 0.0
        %691 = vmatprep.subr.mxu0 0.0
        %692 = vmatpush2.xpose.msra.mxu0 0.0
        %693 = vmatprep.subr.mxu0 0.0
        %694 = vmatpush2.xpose.msra.mxu0 0.0
        %695 = vmatprep.subr.mxu0 0.0
        %696 = vmatpush2.xpose.msra.mxu0 0.0
        %697 = vmatprep.subr.mxu0 0.0
        %698 = vmatpush2.xpose.msra.mxu0 0.0
        %699 = vmatprep.subr.mxu0 0.0
        %700 = vmatpush2.xpose.msra.mxu0 0.0
        %701 = vmatprep.subr.mxu0 0.0
        %702 = vmatpush2.xpose.msra.mxu0 0.0
        %703 = vmatprep.subr.mxu0 0.0
        %704 = vmatpush2.xpose.msra.mxu0 0.0
        %705 = vmatprep.subr.mxu0 0.0
        %706 = vmatpush2.xpose.msra.mxu0 0.0
        %707 = vmatprep.subr.mxu0 0.0
        %708 = vmatpush2.xpose.msra.mxu0 0.0
        %709 = vmatprep.subr.mxu0 0.0
        %710 = vmatpush2.xpose.msra.mxu0 0.0
        %711 = vmatprep.subr.mxu0 0.0
        %712 = vmatpush2.xpose.msra.mxu0 0.0
        %713 = vmatprep.subr.mxu0 0.0
        %714 = vmatpush2.xpose.msra.mxu0 0.0
        %715 = vmatprep.subr.mxu0 0.0
        %716 = vmatpush2.xpose.msra.mxu0 0.0
        %717 = vmatprep.subr.mxu0 0.0
        %718 = vmatpush2.xpose.msra.mxu0 0.0
        %719 = vmatprep.subr.mxu0 0.0
        %720 = vmatpush2.xpose.msra.mxu0 0.0
        %721 = vmatprep.mubr.f32.mxu0 0.0
        %722 = vmatmul.mubr.f32.gmra.mxu0 %v491
        %v723 = vpop.f32.mrf.mxu0
        %v724 = vadd.f32 0.0, %v723
        %v725 = vpop.f32.mrf.mxu0
        %726 = vmatprep.mubr.f32.mxu0 0.0
        %727 = vmatmul.mubr.f32.gmra.mxu0 %v494
        %v728 = vpop.f32.mrf.mxu0
        %v729 = vadd.f32 0.0, %v728
        %v730 = vpop.f32.mrf.mxu0
        %731 = vdwg.mxu0
        %vm732 = vcmask 130048
        %v733 = vsel %vm732, %v724, -inf
        %734 = vmax.xlane.f32.xlu0 %v733
        %v735 = vpop.xlane.xlu0 %734
        %v736 = vsel %vm732, %v729, -inf
        %737 = vmax.xlane.f32.xlu0 %v736
        %v738 = vpop.xlane.xlu0 %737
        %v739 = vsub.f32 %v724, %v735
        %v740 = vsub.f32 %v729, %v738
        %v741 = vmul.f32 %v739, 1.442695
        %v742 = vpow.pop %v741
        %v743 = vmul.f32 %v740, 1.442695
        %v744 = vpow.pop %v743
        %v745 = vsel %vm732, %v742, 0.0
        %746 = vadd.xlane.f32.xlu0 %v745
        %v747 = vpop.xlane.xlu0 %746
        %v748 = vsel %vm732, %v744, 0.0
        %749 = vadd.xlane.f32.xlu0 %v748
        %v750 = vpop.xlane.xlu0 %749
        %v751 = vrcp.pop %v747
        %v752 = vrcp.pop %v750
        %v753 = vmul.f32 %v742, %v751
        %v754 = vmul.f32 %v744, %v752
        %v756 = vsel %vm732, %v753, 0
        %v759 = vsel %vm732, %v754, 0
        %761 = vmatprep.subr.mxu0 0.0
        %762 = vmatpush1.msra.mxu0 0.0
        %763 = vmatprep.subr.mxu0 0.0
        %764 = vmatpush1.msra.mxu0 0.0
        %765 = vmatprep.subr.mxu0 0.0
        %766 = vmatpush1.msra.mxu0 0.0
        %767 = vmatprep.subr.mxu0 0.0
        %768 = vmatpush1.msra.mxu0 0.0
        %769 = vmatprep.subr.mxu0 0.0
        %770 = vmatpush1.msra.mxu0 0.0
        %771 = vmatprep.subr.mxu0 0.0
        %772 = vmatpush1.msra.mxu0 0.0
        %773 = vmatprep.subr.mxu0 0.0
        %774 = vmatpush1.msra.mxu0 0.0
        %775 = vmatprep.subr.mxu0 0.0
        %776 = vmatpush1.msra.mxu0 0.0
        %777 = vmatprep.subr.mxu0 0.0
        %778 = vmatpush1.msra.mxu0 0.0
        %779 = vmatprep.subr.mxu0 0.0
        %780 = vmatpush1.msra.mxu0 0.0
        %781 = vmatprep.subr.mxu0 0.0
        %782 = vmatpush1.msra.mxu0 0.0
        %783 = vmatprep.subr.mxu0 0.0
        %784 = vmatpush1.msra.mxu0 0.0
        %785 = vmatprep.subr.mxu0 0.0
        %786 = vmatpush1.msra.mxu0 0.0
        %787 = vmatprep.subr.mxu0 0.0
        %788 = vmatpush1.msra.mxu0 0.0
        %789 = vmatprep.subr.mxu0 0.0
        %790 = vmatpush1.msra.mxu0 %v654
        %791 = vmatprep.subr.mxu0 0.0
        %792 = vmatpush1.msra.mxu0 %v651
        %793 = vmatprep.subr.mxu0 0.0
        %794 = vmatpush2.msra.mxu0 0.0
        %795 = vmatprep.subr.mxu0 0.0
        %796 = vmatpush2.msra.mxu0 0.0
        %797 = vmatprep.subr.mxu0 0.0
        %798 = vmatpush2.msra.mxu0 0.0
        %799 = vmatprep.subr.mxu0 0.0
        %800 = vmatpush2.msra.mxu0 0.0
        %801 = vmatprep.subr.mxu0 0.0
        %802 = vmatpush2.msra.mxu0 0.0
        %803 = vmatprep.subr.mxu0 0.0
        %804 = vmatpush2.msra.mxu0 0.0
        %805 = vmatprep.subr.mxu0 0.0
        %806 = vmatpush2.msra.mxu0 0.0
        %807 = vmatprep.subr.mxu0 0.0
        %808 = vmatpush2.msra.mxu0 0.0
        %809 = vmatprep.subr.mxu0 0.0
        %810 = vmatpush2.msra.mxu0 0.0
        %811 = vmatprep.subr.mxu0 0.0
        %812 = vmatpush2.msra.mxu0 0.0
        %813 = vmatprep.subr.mxu0 0.0
        %814 = vmatpush2.msra.mxu0 0.0
        %815 = vmatprep.subr.mxu0 0.0
        %816 = vmatpush2.msra.mxu0 0.0
        %817 = vmatprep.subr.mxu0 0.0
        %818 = vmatpush2.msra.mxu0 0.0
        %819 = vmatprep.subr.mxu0 0.0
        %820 = vmatpush2.msra.mxu0 0.0
        %821 = vmatprep.subr.mxu0 0.0
        %822 = vmatpush2.msra.mxu0 0.0
        %823 = vmatprep.subr.mxu0 0.0
        %824 = vmatpush2.msra.mxu0 0.0
        %825 = vmatprep.mubr.f32.mxu0 0.0
        %826 = vmatmul.mubr.f32.gmra.mxu0 %v756
        %v827 = vpop.f32.mrf.mxu0
        %v828 = vadd.f32 0.0, %v827
        %v829 = vpop.f32.mrf.mxu0
        %830 = vmatprep.mubr.f32.mxu0 0.0
        %831 = vmatmul.mubr.f32.gmra.mxu0 %v759
        %v832 = vpop.f32.mrf.mxu0
        %v833 = vadd.f32 0.0, %v832
        %v834 = vpop.f32.mrf.mxu0
        %835 = vdwg.mxu0
        %v836 = vpack.c.bf16 %v833, %v828
        %v837 = vld [vmem:[#allocation10] sm:$0xff]
        %v838 = vld [vmem:[#allocation10 + $0x8] sm:$0xff]
        %v839 = vld [vmem:[#allocation10 + $0x10] sm:$0xff]
        %v840 = vld [vmem:[#allocation10 + $0x18] sm:$0xff]
        %v841 = vld [vmem:[#allocation10 + $0x20] sm:$0xff]
        %v842 = vld [vmem:[#allocation10 + $0x28] sm:$0xff]
        %v843 = vld [vmem:[#allocation10 + $0x30] sm:$0xff]
        %v844 = vld [vmem:[#allocation10 + $0x38] sm:$0xff]
        %v845 = vld [vmem:[#allocation10 + $0x40] sm:$0xff]
        %v846 = vld [vmem:[#allocation10 + $0x48] sm:$0xff]
        %v847 = vld [vmem:[#allocation10 + $0x50] sm:$0xff]
        %v848 = vld [vmem:[#allocation10 + $0x58] sm:$0xff]
        %v849 = vld [vmem:[#allocation10 + $0x60] sm:$0xff]
        %v850 = vld [vmem:[#allocation10 + $0x68] sm:$0xff]
        %v851 = vld [vmem:[#allocation10 + $0x70] sm:$0xff]
        %v852 = vld [vmem:[#allocation10 + $0x78] sm:$0xff]
        %v853 = vld [vmem:[%s8] sm:$0x3]
        %v855 = vlaneseq
        %v856 = vshrl.u32 %v855, 7
        %v857 = vsub.s32 0, %v856
        %v858 = vrot.slane %v853, %v857
        %v859 = vlaneseq
        %v860 = vshrl.u32 %v859, 7
        %v861 = vsub.s32 1, %v860
        %v862 = vrot.slane %v853, %v861
        %v881 = vunpack.c.l.b16 %v837
        %v882 = vunpack.c.h.b16 %v837
        %v883 = vunpack.c.l.b16 %v838
        %v884 = vunpack.c.h.b16 %v838
        %v885 = vunpack.c.l.b16 %v839
        %v886 = vunpack.c.h.b16 %v839
        %v887 = vunpack.c.l.b16 %v840
        %v888 = vunpack.c.h.b16 %v840
        %v889 = vunpack.c.l.b16 %v841
        %v890 = vunpack.c.h.b16 %v841
        %v891 = vunpack.c.l.b16 %v842
        %v892 = vunpack.c.h.b16 %v842
        %v893 = vunpack.c.l.b16 %v843
        %v894 = vunpack.c.h.b16 %v843
        %v895 = vunpack.c.l.b16 %v844
        %v896 = vunpack.c.h.b16 %v844
        %v897 = vunpack.c.l.b16 %v845
        %v898 = vunpack.c.h.b16 %v845
        %v899 = vunpack.c.l.b16 %v846
        %v900 = vunpack.c.h.b16 %v846
        %v901 = vunpack.c.l.b16 %v847
        %v902 = vunpack.c.h.b16 %v847
        %v903 = vunpack.c.l.b16 %v848
        %v904 = vunpack.c.h.b16 %v848
        %v905 = vunpack.c.l.b16 %v849
        %v906 = vunpack.c.h.b16 %v849
        %v907 = vunpack.c.l.b16 %v850
        %v908 = vunpack.c.h.b16 %v850
        %v909 = vunpack.c.l.b16 %v851
        %v910 = vunpack.c.h.b16 %v851
        %v911 = vunpack.c.l.b16 %v852
        %v912 = vunpack.c.h.b16 %v852
        %v913 = vpack.c.b16 %v883, %v881
        %v914 = vpack.c.b16 %v884, %v882
        %v915 = vpack.c.b16 %v887, %v885
        %v916 = vpack.c.b16 %v888, %v886
        %v917 = vpack.c.b16 %v891, %v889
        %v918 = vpack.c.b16 %v892, %v890
        %v919 = vpack.c.b16 %v895, %v893
        %v920 = vpack.c.b16 %v896, %v894
        %v921 = vpack.c.b16 %v899, %v897
        %v922 = vpack.c.b16 %v900, %v898
        %v923 = vpack.c.b16 %v903, %v901
        %v924 = vpack.c.b16 %v904, %v902
        %v925 = vpack.c.b16 %v907, %v905
        %v926 = vpack.c.b16 %v908, %v906
        %v927 = vpack.c.b16 %v911, %v909
        %v928 = vpack.c.b16 %v912, %v910
        %945 = vmatprep.subr.bf16.mxu0 %v928
        %946 = vmatpush1.bf16.msra.mxu0 %v927
        %947 = vmatprep.subr.bf16.mxu0 %v926
        %948 = vmatpush1.bf16.msra.mxu0 %v925
        %949 = vmatprep.subr.bf16.mxu0 %v924
        %950 = vmatpush1.bf16.msra.mxu0 %v923
        %951 = vmatprep.subr.bf16.mxu0 %v922
        %952 = vmatpush1.bf16.msra.mxu0 %v921
        %953 = vmatprep.subr.bf16.mxu0 %v920
        %954 = vmatpush1.bf16.msra.mxu0 %v919
        %955 = vmatprep.subr.bf16.mxu0 %v918
        %956 = vmatpush1.bf16.msra.mxu0 %v917
        %957 = vmatprep.subr.bf16.mxu0 %v916
        %958 = vmatpush1.bf16.msra.mxu0 %v915
        %959 = vmatprep.subr.bf16.mxu0 %v914
        %960 = vmatpush1.bf16.msra.mxu0 %v913
        %961 = vmatprep.subr.bf16.mxu0 0
        %962 = vmatpush2.bf16.msra.mxu0 0
        %963 = vmatprep.subr.bf16.mxu0 0
        %964 = vmatpush2.bf16.msra.mxu0 0
        %965 = vmatprep.subr.bf16.mxu0 0
        %966 = vmatpush2.bf16.msra.mxu0 0
        %967 = vmatprep.subr.bf16.mxu0 0
        %968 = vmatpush2.bf16.msra.mxu0 0
        %969 = vmatprep.subr.bf16.mxu0 0
        %970 = vmatpush2.bf16.msra.mxu0 0
        %971 = vmatprep.subr.bf16.mxu0 0
        %972 = vmatpush2.bf16.msra.mxu0 0
        %973 = vmatprep.subr.bf16.mxu0 0
        %974 = vmatpush2.bf16.msra.mxu0 0
        %975 = vmatprep.subr.bf16.mxu0 0
        %976 = vmatpush2.bf16.msra.mxu0 0
        %977 = vmatprep.mubr.bf16.mxu0 0
        %978 = vmatmul.mubr.bf16.gmra.mxu0 %v836
        %v979 = vpop.f32.mrf.mxu0
        %v980 = vadd.f32 %v858, %v979
        %v981 = vpop.f32.mrf.mxu0
        %v982 = vadd.f32 %v862, %v981
        %v983 = vpop.f32.mrf.mxu0
        %v984 = vadd.f32 %v858, %v983
        %v985 = vpop.f32.mrf.mxu0
        %v986 = vadd.f32 %v862, %v985
        %987 = vdwg.mxu0
        %988 = vst [vmem:[%s408] sm:$0xff] %v980
        %989 = vst [vmem:[%s408 + $0x8] sm:$0xff] %v982
        %990 = vst [vmem:[%s408 + $0x10] sm:$0xff] %v984
        %991 = vst [vmem:[%s408 + $0x18] sm:$0xff] %v986
        %s992 = sand.u32 %s230, 1
        %s993 = scalar_lea.sflag [#allocation4], %s992
        %s994 = sand.u32 %s230, 1
        %s995 = smul.addr %s994, 32
        %s996 = scalar_lea.vmem [#allocation11], %s995
        // Predicated region
        $region77: #{tpu_custom_call.1} parent=55 // pred_check
          %p997 = pneg %p240
        $region78: #{tpu_custom_call.1} parent=55 // pred_check_branch
          %999 = sbr.rel (%p997) target = $region80
        $region79: #{tpu_custom_call.1} parent=55 // pred_region
          %s1001 = ssub.s32 512, 512
          %1002 = vsyncadd %s993, %s1001
          %s1003 = smul.addr %s28, 4
          %s1004 = smul.addr %s1003, 128
          %s1005 = scalar_lea.hbm %s9, %s1004
          %s1006 = sshll.u32 %s996, 4
          %s1007 = int_to_ptr.vmem [resolvable:$true] %s1006
          %1012 = dma.vmem_to_hbm [thread:$0]  %s1007, 512, %s1005, %s993, 256, 256, 16
        $region80: #{tpu_custom_call.1} parent=55 // pred_fallthru
          _
      $region56: #{tpu_custom_call.1} parent=5 // pred_fallthru
        _
      %p1013 = scmp.le.s32.totalorder 2, %s23
      // Predicated region
      $region81: #{tpu_custom_call.1} parent=5 // pred_check
        %p1014 = pneg %p1013
      $region82: #{tpu_custom_call.1} parent=5 // pred_check_branch
        %1016 = sbr.rel (%p1014) target = $region84
      $region83: #{tpu_custom_call.1} parent=5 // pred_region
        %s1017 = ssub.s32 %s23, 2
        // Predicated region
        $region85: #{tpu_custom_call.1} parent=83 // pred_check
          %p1018 = pneg %p246
        $region86: #{tpu_custom_call.1} parent=83 // pred_check_branch
          %1020 = sbr.rel (%p1018) target = $region88
        $region87: #{tpu_custom_call.1} parent=83 // pred_region
          %s1021 = sand.u32 %s231, 1
          %s1022 = scalar_lea.sflag [#allocation4], %s1021
          %s1023 = sand.u32 %s231, 1
          %s1024 = smul.addr %s1023, 32
          %s1025 = scalar_lea.vmem [#allocation11], %s1024
          %1026 = dma.done %s1022, 512
        $region88: #{tpu_custom_call.1} parent=83 // pred_fallthru
          _
      $region84: #{tpu_custom_call.1} parent=5 // pred_fallthru
        _
    $region6: #{tpu_custom_call.1} parent=1 // loop_footer
      %s27 = sadd.s32 1, %s23
    $region7: #{tpu_custom_call.1} parent=1 // loop_footer_branch
      %22 = sbr.rel target = $region3
    $region8: #{tpu_custom_call.1} parent=1 // loop_exit
      _
    %1027 = vsyncpa [#allocation3], 1
    %s1028 = scalar_lea.sflag [#allocation3], 1
    %1029 = vsyncpa %s1028, 1
    %1030 = vsyncpa [#allocation6], 1
    %1031 = vsyncpa [#allocation9], 1
    %1032 = vsyncpa [#allocation4], 1
    %s1033 = scalar_lea.sflag [#allocation4], 1
    %1034 = vsyncpa %s1033, 1

</llo_original>
